<compile_context>
chip_gen: v6e
topology: v6e:2x2x1
jax: 0.10.0
libtpu: 0.0.40
codegen_flags: <defaults>
</compile_context>

<pallas_src>
import functools

import jax
import jax.numpy as jnp
from jax.experimental import pallas as pl
from jax.experimental.pallas import tpu as pltpu


# ----------------------------- Pallas kernels ------------------------------

def _feature_transform_kernel(x_ref, w_ref, out_ref):
    """out_tile = X_tile @ W  (f32 MXU accumulate)."""
    out_ref[...] = jnp.dot(x_ref[...], w_ref[...],
                           preferred_element_type=jnp.float32)


def _aggregate_kernel(adj_ref, xw_ref, b_ref, out_ref, acc_ref, *, act):
    """out_tile = act(A_hat_rowtile @ XW + b), neighbour (K) axis tiled.

    adj_ref: (TM, TK)   tile of normalized adjacency A_hat
    xw_ref:  (TK, Fout) K-slice of the pre-transformed features
    b_ref:   (1, Fout)  bias (padded cols: 0 for relu, -1e30 for log_softmax)
    out_ref: (TM, Fout) written once, at the last K step
    acc_ref: (TM, Fout) f32 accumulator scratch
    """
    k = pl.program_id(1)

    @pl.when(k == 0)
    def _():
        acc_ref[...] = jnp.zeros_like(acc_ref)

    acc_ref[...] += jnp.dot(adj_ref[...], xw_ref[...],
                            preferred_element_type=jnp.float32)

    @pl.when(k == pl.num_programs(1) - 1)
    def _():
        h = acc_ref[...] + b_ref[...]
        if act == "relu":
            out_ref[...] = jnp.maximum(h, 0.0)
        else:  # row-wise log_softmax; padded class cols carry a -1e30 bias
            m = jnp.max(h, axis=-1, keepdims=True)
            s = h - m
            lse = jnp.log(jnp.sum(jnp.exp(s), axis=-1, keepdims=True))
            out_ref[...] = s - lse


# ------------------------------ kernel wrappers -----------------------------

def _feature_transform(x, w, *, tm):
    n_p, fin = x.shape
    fout = w.shape[1]
    return pl.pallas_call(
        _feature_transform_kernel,
        out_shape=jax.ShapeDtypeStruct((n_p, fout), jnp.float32),
        grid=(n_p // tm,),
        in_specs=[
            pl.BlockSpec((tm, fin), lambda i: (i, 0)),      # X row tile
            pl.BlockSpec((fin, fout), lambda i: (0, 0)),    # full weight
        ],
        out_specs=pl.BlockSpec((tm, fout), lambda i: (i, 0)),
        compiler_params=pltpu.CompilerParams(
            dimension_semantics=("parallel",)),
    )(x, w)


def _aggregate(adj, xw, b, *, act, tm, tk):
    n_p = adj.shape[0]
    fout = xw.shape[1]
    return pl.pallas_call(
        functools.partial(_aggregate_kernel, act=act),
        out_shape=jax.ShapeDtypeStruct((n_p, fout), jnp.float32),
        grid=(n_p // tm, n_p // tk),
        in_specs=[
            pl.BlockSpec((tm, tk), lambda i, k: (i, k)),    # A_hat tile
            pl.BlockSpec((tk, fout), lambda i, k: (k, 0)),  # XW K-slice
            pl.BlockSpec((1, fout), lambda i, k: (0, 0)),   # bias
        ],
        out_specs=pl.BlockSpec((tm, fout), lambda i, k: (i, 0)),
        scratch_shapes=[pltpu.VMEM((tm, fout), jnp.float32)],
        compiler_params=pltpu.CompilerParams(
            dimension_semantics=("parallel", "arbitrary")),
    )(adj, xw, b)


# ------------------------------- host wrapper -------------------------------

def _round_up(v, m):
    return ((v + m - 1) // m) * m


def _choose_tiles(n):
    """Return (padded node count, row tile tm, neighbour tile tk)."""
    if n <= 512:
        n_p = _round_up(n, 8)          # single tile; blocks equal full dims
        return n_p, n_p, n_p
    tm, tk = 256, 512                  # lane/sublane aligned tiles
    return _round_up(n, 512), tm, tk   # 512 = lcm(tm, tk)


def _gcn_norm_dense(edge_index, edge_weight, num_nodes):
    """PyG gcn_norm as a dense (N, N) matrix: D^-1/2 (A + I) D^-1/2."""
    # TODO(synk): sparse edge_index scatter-add has no clean Pallas TPU
    # equivalent; the normalized adjacency is built densely in the JAX wrapper.
    if edge_weight is None:
        edge_weight = jnp.ones((edge_index.shape[1],), jnp.float32)
    a = jnp.zeros((num_nodes, num_nodes), jnp.float32)
    a = a.at[edge_index[0], edge_index[1]].add(edge_weight)
    a = a + jnp.eye(num_nodes, dtype=jnp.float32)  # self-loops, weight 1
    deg = jnp.sum(a, axis=1)
    d_inv_sqrt = jax.lax.rsqrt(deg)
    return a * d_inv_sqrt[:, None] * d_inv_sqrt[None, :]


@jax.jit
def gcn_forward(x, edge_index, edge_weight, w1, b1, w2, b2):
    """2-layer GCN forward (eval mode). Returns (N, nclass) log-probabilities."""
    # TODO(synk): training-mode dropout and the optional LayerNorm branches
    # (layer_norm_first / use_ln) are not implemented; defaults = eval forward.
    n, nfeat = x.shape
    nhid = w1.shape[1]
    nclass = w2.shape[1]

    a_hat = _gcn_norm_dense(edge_index, edge_weight, n)

    # --- pad to lane-dense (x128) / sublane-aligned (x8) shapes ------------
    n_p, tm, tk = _choose_tiles(n)
    f_p = _round_up(nfeat, 128)
    h_p = _round_up(nhid, 128)
    c_p = _round_up(nclass, 128)

    a_p = jnp.pad(a_hat, ((0, n_p - n), (0, n_p - n)))
    x_p = jnp.pad(x, ((0, n_p - n), (0, f_p - nfeat)))
    w1_p = jnp.pad(w1, ((0, f_p - nfeat), (0, h_p - nhid)))
    b1_p = jnp.pad(b1.reshape(1, -1), ((0, 0), (0, h_p - nhid)))
    w2_p = jnp.pad(w2, ((0, h_p - nhid), (0, c_p - nclass)))
    # Padded class columns get a huge negative bias so log_softmax ignores them.
    b2_p = jnp.pad(b2.reshape(1, -1), ((0, 0), (0, c_p - nclass)),
                   constant_values=-1e30)

    # Layer 1: relu(A_hat @ (X @ W1) + b1)    (dropout is identity in eval)
    xw1 = _feature_transform(x_p, w1_p, tm=tm)
    h1 = _aggregate(a_p, xw1, b1_p, act="relu", tm=tm, tk=tk)

    # Layer 2 + log_softmax: log_softmax(A_hat @ (h1 @ W2) + b2)
    hw2 = _feature_transform(h1, w2_p, tm=tm)
    out = _aggregate(a_p, hw2, b2_p, act="log_softmax", tm=tm, tk=tk)

    return out[:n, :nclass]


if __name__ == "__main__":
    # Small shapes consistent with the module: 16 nodes, nfeat=32, nhid=32,
    # nclass=7, undirected ring graph with unit edge weights.
    N, NFEAT, NHID, NCLASS = 16, 32, 32, 7

    key = jax.random.PRNGKey(0)
    kx, k1, k2, kb1, kb2 = jax.random.split(key, 5)

    x = jax.random.normal(kx, (N, NFEAT), jnp.float32)

    src = jnp.arange(N, dtype=jnp.int32)
    dst = (src + 1) % N
    edge_index = jnp.stack([jnp.concatenate([src, dst]),
                            jnp.concatenate([dst, src])])
    edge_weight = jnp.ones((edge_index.shape[1],), jnp.float32)

    def glorot(k, shape):
        lim = jnp.sqrt(6.0 / (shape[0] + shape[1]))
        return jax.random.uniform(k, shape, jnp.float32, -lim, lim)

    w1 = glorot(k1, (NFEAT, NHID))
    b1 = jax.random.uniform(kb1, (NHID,), jnp.float32, -0.1, 0.1)
    w2 = glorot(k2, (NHID, NCLASS))
    b2 = jax.random.uniform(kb2, (NCLASS,), jnp.float32, -0.1, 0.1)

    out = gcn_forward(x, edge_index, edge_weight, w1, b1, w2, b2)
    jax.block_until_ready(out)

    # Pure-JAX reference of the same forward pass.
    a_hat = _gcn_norm_dense(edge_index, edge_weight, N)
    h1_ref = jnp.maximum(a_hat @ x @ w1 + b1, 0.0)
    logits_ref = a_hat @ h1_ref @ w2 + b2
    ref = logits_ref - jax.scipy.special.logsumexp(
        logits_ref, axis=1, keepdims=True)

    assert out.shape == (N, NCLASS)
    assert jnp.allclose(out, ref, atol=1e-4, rtol=1e-4), float(
        jnp.max(jnp.abs(out - ref)))
    print("KERNEL_OK")
</pallas_src>

<mosaic_0001>
module attributes {stable_mosaic.version = 11 : i64} {
  func.func private @main(%arg0: i32) attributes {dimension_semantics = [#tpu.dimension_semantics<core_parallel>], iteration_bounds = array<i64: 2>, tpu.core_type = #tpu.core_type<sc_scalar_subcore>, window_params = []} {
    return
  }
}

module attributes {stable_mosaic.version = 11 : i64} {
  func.func private @main(%arg0: i32) attributes {dimension_semantics = [#tpu.dimension_semantics<core_parallel>], iteration_bounds = array<i64: 2>, tpu.core_type = #tpu.core_type<sc_scalar_subcore>, window_params = []} {
    return
  }
}

module attributes {stable_mosaic.version = 11 : i64} {
  func.func @_feature_transform_kernel(%arg0: i32, %arg1: memref<16x128xf32, #tpu.memory_space<vmem>>, %arg2: memref<128x128xf32, #tpu.memory_space<vmem>>, %arg3: memref<16x128xf32, #tpu.memory_space<vmem>>) attributes {dimension_semantics = [#tpu.dimension_semantics<parallel>], iteration_bounds = array<i64: 1>, scalar_prefetch = 0 : i64, scratch_operands = 0 : i64, tpu.core_type = #tpu.core_type<tc>, window_params = [{transform_indices = @transform_0, window_bounds = array<i64: 16, 128>}, {pipeline_mode = #tpu.pipeline_mode<synchronous>, transform_indices = @transform_1, window_bounds = array<i64: 128, 128>}, {transform_indices = @transform_2, window_bounds = array<i64: 16, 128>}]} {
    %c0 = arith.constant 0 : index
    %c0_0 = arith.constant 0 : index
    %0 = vector.load %arg1[%c0, %c0_0] : memref<16x128xf32, #tpu.memory_space<vmem>>, vector<16x128xf32>
    %c0_1 = arith.constant 0 : index
    %c0_2 = arith.constant 0 : index
    %1 = vector.load %arg2[%c0_1, %c0_2] : memref<128x128xf32, #tpu.memory_space<vmem>>, vector<128x128xf32>
    %cst = arith.constant dense<0.000000e+00> : vector<16x128xf32>
    %2 = tpu.matmul %0, %1, %cst {dimension_numbers = #tpu.dot_dimension_numbers<[1], [0], [0], [1], [0, 0, 1, 1], [], []>} : vector<16x128xf32>, vector<128x128xf32>, vector<16x128xf32> -> vector<16x128xf32>
    %c0_3 = arith.constant 0 : index
    %c0_4 = arith.constant 0 : index
    %3 = vector.load %arg3[%c0_3, %c0_4] : memref<16x128xf32, #tpu.memory_space<vmem>>, vector<16x128xf32>
    tpu.vector_store %arg3[%c0_3, %c0_4], %2 {strides = array<i32>} : memref<16x128xf32, #tpu.memory_space<vmem>>, vector<16x128xf32>,
    return
  }
  func.func @transform_0(%arg0: i32) -> (i32, i32) {
    %c0_i32 = arith.constant 0 : i32
    %c0_i32_0 = arith.constant 0 : i32
    return %arg0, %c0_i32 : i32, i32
  }
  func.func @transform_1(%arg0: i32) -> (i32, i32) {
    %c0_i32 = arith.constant 0 : i32
    %c0_i32_0 = arith.constant 0 : i32
    %c0_i32_1 = arith.constant 0 : i32
    return %c0_i32, %c0_i32_0 : i32, i32
  }
  func.func @transform_2(%arg0: i32) -> (i32, i32) {
    %c0_i32 = arith.constant 0 : i32
    %c0_i32_0 = arith.constant 0 : i32
    return %arg0, %c0_i32 : i32, i32
  }
}

module attributes {stable_mosaic.version = 11 : i64} {
  func.func @_aggregate_kernel(%arg0: i32, %arg1: i32, %arg2: memref<16x16xf32, #tpu.memory_space<vmem>>, %arg3: memref<16x128xf32, #tpu.memory_space<vmem>>, %arg4: memref<1x128xf32, #tpu.memory_space<vmem>>, %arg5: memref<16x128xf32, #tpu.memory_space<vmem>>, %arg6: memref<16x128xf32, #tpu.memory_space<vmem>>) attributes {dimension_semantics = [#tpu.dimension_semantics<parallel>, #tpu.dimension_semantics<arbitrary>], iteration_bounds = array<i64: 1, 1>, scalar_prefetch = 0 : i64, scratch_operands = 1 : i64, tpu.core_type = #tpu.core_type<tc>, window_params = [{transform_indices = @transform_0, window_bounds = array<i64: 16, 16>}, {transform_indices = @transform_1, window_bounds = array<i64: 16, 128>}, {pipeline_mode = #tpu.pipeline_mode<synchronous>, transform_indices = @transform_2, window_bounds = array<i64: 1, 128>}, {transform_indices = @transform_3, window_bounds = array<i64: 16, 128>}]} {
    %c0_i32 = arith.constant 0 : i32
    %0 = arith.cmpi eq, %arg1, %c0_i32 : i32
    %1 = arith.extui %0 : i1 to i32
    %c0_i32_0 = arith.constant 0 : i32
    %2 = arith.cmpi ne, %1, %c0_i32_0 : i32
    scf.if %2 {
      %cst_10 = arith.constant 0.000000e+00 : f32
      %12 = vector.broadcast %cst_10 : f32 to vector<16x128xf32>
      %c0_11 = arith.constant 0 : index
      %c0_12 = arith.constant 0 : index
      %13 = vector.load %arg6[%c0_11, %c0_12] : memref<16x128xf32, #tpu.memory_space<vmem>>, vector<16x128xf32>
      tpu.vector_store %arg6[%c0_11, %c0_12], %12 {strides = array<i32>} : memref<16x128xf32, #tpu.memory_space<vmem>>, vector<16x128xf32>,
    } else {
    }
    %c0 = arith.constant 0 : index
    %c0_1 = arith.constant 0 : index
    %3 = vector.load %arg6[%c0, %c0_1] : memref<16x128xf32, #tpu.memory_space<vmem>>, vector<16x128xf32>
    %c0_2 = arith.constant 0 : index
    %c0_3 = arith.constant 0 : index
    %4 = vector.load %arg2[%c0_2, %c0_3] : memref<16x16xf32, #tpu.memory_space<vmem>>, vector<16x16xf32>
    %c0_4 = arith.constant 0 : index
    %c0_5 = arith.constant 0 : index
    %5 = vector.load %arg3[%c0_4, %c0_5] : memref<16x128xf32, #tpu.memory_space<vmem>>, vector<16x128xf32>
    %cst = arith.constant dense<0.000000e+00> : vector<16x128xf32>
    %6 = tpu.matmul %4, %5, %cst {dimension_numbers = #tpu.dot_dimension_numbers<[1], [0], [0], [1], [0, 0, 1, 1], [], []>} : vector<16x16xf32>, vector<16x128xf32>, vector<16x128xf32> -> vector<16x128xf32>
    %7 = arith.addf %3, %6 : vector<16x128xf32>
    %c0_6 = arith.constant 0 : index
    %c0_7 = arith.constant 0 : index
    %8 = vector.load %arg6[%c0_6, %c0_7] : memref<16x128xf32, #tpu.memory_space<vmem>>, vector<16x128xf32>
    tpu.vector_store %arg6[%c0_6, %c0_7], %7 {strides = array<i32>} : memref<16x128xf32, #tpu.memory_space<vmem>>, vector<16x128xf32>,
    %c0_i32_8 = arith.constant 0 : i32
    %9 = arith.cmpi eq, %arg1, %c0_i32_8 : i32
    %10 = arith.extui %9 : i1 to i32
    %c0_i32_9 = arith.constant 0 : i32
    %11 = arith.cmpi ne, %10, %c0_i32_9 : i32
    scf.if %11 {
      %c0_10 = arith.constant 0 : index
      %c0_11 = arith.constant 0 : index
      %12 = vector.load %arg6[%c0_10, %c0_11] : memref<16x128xf32, #tpu.memory_space<vmem>>, vector<16x128xf32>
      %c0_12 = arith.constant 0 : index
      %c0_13 = arith.constant 0 : index
      %13 = vector.load %arg4[%c0_12, %c0_13] : memref<1x128xf32, #tpu.memory_space<vmem>>, vector<1x128xf32>
      %14 = vector.broadcast %13 : vector<1x128xf32> to vector<16x128xf32>
      %15 = arith.addf %12, %14 : vector<16x128xf32>
      %cst_14 = arith.constant dense<0xFF800000> : vector<16xf32>
      %16 = vector.multi_reduction <maximumf>, %15, %cst_14 [1] : vector<16x128xf32> to vector<16xf32>
      %17 = vector.shape_cast %16 : vector<16xf32> to vector<16x1xf32>
      %18 = vector.broadcast %17 : vector<16x1xf32> to vector<16x128xf32>
      %19 = arith.subf %15, %18 : vector<16x128xf32>
      %20 = math.exp %19 : vector<16x128xf32>
      %cst_15 = arith.constant dense<0.000000e+00> : vector<16xf32>
      %21 = vector.multi_reduction <add>, %20, %cst_15 [1] : vector<16x128xf32> to vector<16xf32>
      %22 = vector.shape_cast %21 : vector<16xf32> to vector<16x1xf32>
      %23 = math.log %22 : vector<16x1xf32>
      %24 = vector.broadcast %23 : vector<16x1xf32> to vector<16x128xf32>
      %25 = arith.subf %19, %24 : vector<16x128xf32>
      %c0_16 = arith.constant 0 : index
      %c0_17 = arith.constant 0 : index
      %26 = vector.load %arg5[%c0_16, %c0_17] : memref<16x128xf32, #tpu.memory_space<vmem>>, vector<16x128xf32>
      tpu.vector_store %arg5[%c0_16, %c0_17], %25 {strides = array<i32>} : memref<16x128xf32, #tpu.memory_space<vmem>>, vector<16x128xf32>,
    } else {
    }
    return
  }
  func.func @transform_0(%arg0: i32, %arg1: i32) -> (i32, i32) {
    %c0_i32 = arith.constant 0 : i32
    return %arg0, %arg1 : i32, i32
  }
  func.func @transform_1(%arg0: i32, %arg1: i32) -> (i32, i32) {
    %c0_i32 = arith.constant 0 : i32
    %c0_i32_0 = arith.constant 0 : i32
    return %arg1, %c0_i32 : i32, i32
  }
  func.func @transform_2(%arg0: i32, %arg1: i32) -> (i32, i32) {
    %c0_i32 = arith.constant 0 : i32
    %c0_i32_0 = arith.constant 0 : i32
    %c0_i32_1 = arith.constant 0 : i32
    return %c0_i32, %c0_i32_0 : i32, i32
  }
  func.func @transform_3(%arg0: i32, %arg1: i32) -> (i32, i32) {
    %c0_i32 = arith.constant 0 : i32
    %c0_i32_0 = arith.constant 0 : i32
    return %arg0, %c0_i32 : i32, i32
  }
}

module attributes {stable_mosaic.version = 11 : i64} {
  func.func @_aggregate_kernel(%arg0: i32, %arg1: i32, %arg2: memref<16x16xf32, #tpu.memory_space<vmem>>, %arg3: memref<16x128xf32, #tpu.memory_space<vmem>>, %arg4: memref<1x128xf32, #tpu.memory_space<vmem>>, %arg5: memref<16x128xf32, #tpu.memory_space<vmem>>, %arg6: memref<16x128xf32, #tpu.memory_space<vmem>>) attributes {dimension_semantics = [#tpu.dimension_semantics<parallel>, #tpu.dimension_semantics<arbitrary>], iteration_bounds = array<i64: 1, 1>, scalar_prefetch = 0 : i64, scratch_operands = 1 : i64, tpu.core_type = #tpu.core_type<tc>, window_params = [{transform_indices = @transform_0, window_bounds = array<i64: 16, 16>}, {transform_indices = @transform_1, window_bounds = array<i64: 16, 128>}, {pipeline_mode = #tpu.pipeline_mode<synchronous>, transform_indices = @transform_2, window_bounds = array<i64: 1, 128>}, {transform_indices = @transform_3, window_bounds = array<i64: 16, 128>}]} {
    %c0_i32 = arith.constant 0 : i32
    %0 = arith.cmpi eq, %arg1, %c0_i32 : i32
    %1 = arith.extui %0 : i1 to i32
    %c0_i32_0 = arith.constant 0 : i32
    %2 = arith.cmpi ne, %1, %c0_i32_0 : i32
    scf.if %2 {
      %cst_10 = arith.constant 0.000000e+00 : f32
      %12 = vector.broadcast %cst_10 : f32 to vector<16x128xf32>
      %c0_11 = arith.constant 0 : index
      %c0_12 = arith.constant 0 : index
      %13 = vector.load %arg6[%c0_11, %c0_12] : memref<16x128xf32, #tpu.memory_space<vmem>>, vector<16x128xf32>
      tpu.vector_store %arg6[%c0_11, %c0_12], %12 {strides = array<i32>} : memref<16x128xf32, #tpu.memory_space<vmem>>, vector<16x128xf32>,
    } else {
    }
    %c0 = arith.constant 0 : index
    %c0_1 = arith.constant 0 : index
    %3 = vector.load %arg6[%c0, %c0_1] : memref<16x128xf32, #tpu.memory_space<vmem>>, vector<16x128xf32>
    %c0_2 = arith.constant 0 : index
    %c0_3 = arith.constant 0 : index
    %4 = vector.load %arg2[%c0_2, %c0_3] : memref<16x16xf32, #tpu.memory_space<vmem>>, vector<16x16xf32>
    %c0_4 = arith.constant 0 : index
    %c0_5 = arith.constant 0 : index
    %5 = vector.load %arg3[%c0_4, %c0_5] : memref<16x128xf32, #tpu.memory_space<vmem>>, vector<16x128xf32>
    %cst = arith.constant dense<0.000000e+00> : vector<16x128xf32>
    %6 = tpu.matmul %4, %5, %cst {dimension_numbers = #tpu.dot_dimension_numbers<[1], [0], [0], [1], [0, 0, 1, 1], [], []>} : vector<16x16xf32>, vector<16x128xf32>, vector<16x128xf32> -> vector<16x128xf32>
    %7 = arith.addf %3, %6 : vector<16x128xf32>
    %c0_6 = arith.constant 0 : index
    %c0_7 = arith.constant 0 : index
    %8 = vector.load %arg6[%c0_6, %c0_7] : memref<16x128xf32, #tpu.memory_space<vmem>>, vector<16x128xf32>
    tpu.vector_store %arg6[%c0_6, %c0_7], %7 {strides = array<i32>} : memref<16x128xf32, #tpu.memory_space<vmem>>, vector<16x128xf32>,
    %c0_i32_8 = arith.constant 0 : i32
    %9 = arith.cmpi eq, %arg1, %c0_i32_8 : i32
    %10 = arith.extui %9 : i1 to i32
    %c0_i32_9 = arith.constant 0 : i32
    %11 = arith.cmpi ne, %10, %c0_i32_9 : i32
    scf.if %11 {
      %c0_10 = arith.constant 0 : index
      %c0_11 = arith.constant 0 : index
      %12 = vector.load %arg6[%c0_10, %c0_11] : memref<16x128xf32, #tpu.memory_space<vmem>>, vector<16x128xf32>
      %c0_12 = arith.constant 0 : index
      %c0_13 = arith.constant 0 : index
      %13 = vector.load %arg4[%c0_12, %c0_13] : memref<1x128xf32, #tpu.memory_space<vmem>>, vector<1x128xf32>
      %14 = vector.broadcast %13 : vector<1x128xf32> to vector<16x128xf32>
      %15 = arith.addf %12, %14 : vector<16x128xf32>
      %cst_14 = arith.constant 0.000000e+00 : f32
      %16 = vector.broadcast %cst_14 : f32 to vector<16x128xf32>
      %17 = arith.maximumf %15, %16 : vector<16x128xf32>
      %c0_15 = arith.constant 0 : index
      %c0_16 = arith.constant 0 : index
      %18 = vector.load %arg5[%c0_15, %c0_16] : memref<16x128xf32, #tpu.memory_space<vmem>>, vector<16x128xf32>
      tpu.vector_store %arg5[%c0_15, %c0_16], %17 {strides = array<i32>} : memref<16x128xf32, #tpu.memory_space<vmem>>, vector<16x128xf32>,
    } else {
    }
    return
  }
  func.func @transform_0(%arg0: i32, %arg1: i32) -> (i32, i32) {
    %c0_i32 = arith.constant 0 : i32
    return %arg0, %arg1 : i32, i32
  }
  func.func @transform_1(%arg0: i32, %arg1: i32) -> (i32, i32) {
    %c0_i32 = arith.constant 0 : i32
    %c0_i32_0 = arith.constant 0 : i32
    return %arg1, %c0_i32 : i32, i32
  }
  func.func @transform_2(%arg0: i32, %arg1: i32) -> (i32, i32) {
    %c0_i32 = arith.constant 0 : i32
    %c0_i32_0 = arith.constant 0 : i32
    %c0_i32_1 = arith.constant 0 : i32
    return %c0_i32, %c0_i32_0 : i32, i32
  }
  func.func @transform_3(%arg0: i32, %arg1: i32) -> (i32, i32) {
    %c0_i32 = arith.constant 0 : i32
    %c0_i32_0 = arith.constant 0 : i32
    return %arg0, %c0_i32 : i32, i32
  }
}

</mosaic_0001>

<llo_original>
// kernel: gcn_forward.4
$region0: #{gcn_forward.4}
  #allocation0 [shape = 'u32[]', space=smem, size = 0x4, offset = 0x4, fixed_abs, tag = 'smem constant byte address 0x4 - core index']
  #allocation1 [shape = 'u32[144,128]{1,0:T(1,128)}', space=vmem, size = 0x12000, scoped, tag = 'internal scratch']
  %s0 = inlined_call_operand.vmem [shape: f32[16,128], index: 0, kind: input, shape index: {}]
  %s1 = inlined_call_operand.vmem [shape: f32[128,128], index: 1, kind: input, shape index: {}]
  %s2 = inlined_call_operand.vmem [shape: f32[16,128], index: 2, kind: output, shape index: {}]
  %s3 = sld [smem:[#allocation0]]
  $region18: #{gcn_forward.4} parent=0
    _
  %s5 = ssub.s32 1, %s3
  %s6 = scalar_select 0, %s5, %s3
  // Predicated region
  $region2: #{gcn_forward.4} parent=0 // pred_check
    _
  $region3: #{gcn_forward.4} parent=0 // pred_check_branch
    %8 = sbr.rel (0) target = $region5
  $region4: #{gcn_forward.4} parent=0 // pred_region
    _
  $region5: #{gcn_forward.4} parent=0 // pred_fallthru
    _
  // Predicated region
  $region6: #{gcn_forward.4} parent=0 // pred_check
    _
  $region7: #{gcn_forward.4} parent=0 // pred_check_branch
    %10 = sbr.rel (0) target = $region9
  $region8: #{gcn_forward.4} parent=0 // pred_region
    _
  $region9: #{gcn_forward.4} parent=0 // pred_fallthru
    _
  %v11 = vld [vmem:[%s0] sm:$0xff]
  %v12 = vld [vmem:[%s0 + $0x8] sm:$0xff]
  %v13 = vld [vmem:[%s1] sm:$0xff]
  %v14 = vld [vmem:[%s1 + $0x8] sm:$0xff]
  %v15 = vld [vmem:[%s1 + $0x10] sm:$0xff]
  %v16 = vld [vmem:[%s1 + $0x18] sm:$0xff]
  %v17 = vld [vmem:[%s1 + $0x20] sm:$0xff]
  %v18 = vld [vmem:[%s1 + $0x28] sm:$0xff]
  %v19 = vld [vmem:[%s1 + $0x30] sm:$0xff]
  %v20 = vld [vmem:[%s1 + $0x38] sm:$0xff]
  %v21 = vld [vmem:[%s1 + $0x40] sm:$0xff]
  %v22 = vld [vmem:[%s1 + $0x48] sm:$0xff]
  %v23 = vld [vmem:[%s1 + $0x50] sm:$0xff]
  %v24 = vld [vmem:[%s1 + $0x58] sm:$0xff]
  %v25 = vld [vmem:[%s1 + $0x60] sm:$0xff]
  %v26 = vld [vmem:[%s1 + $0x68] sm:$0xff]
  %v27 = vld [vmem:[%s1 + $0x70] sm:$0xff]
  %v28 = vld [vmem:[%s1 + $0x78] sm:$0xff]
  %29 = vmatprep.subr.mxu0 0.0
  %30 = vmatpush1.msra.mxu0 %v28
  %31 = vmatprep.subr.mxu0 0.0
  %32 = vmatpush1.msra.mxu0 %v27
  %33 = vmatprep.subr.mxu0 0.0
  %34 = vmatpush1.msra.mxu0 %v26
  %35 = vmatprep.subr.mxu0 0.0
  %36 = vmatpush1.msra.mxu0 %v25
  %37 = vmatprep.subr.mxu0 0.0
  %38 = vmatpush1.msra.mxu0 %v24
  %39 = vmatprep.subr.mxu0 0.0
  %40 = vmatpush1.msra.mxu0 %v23
  %41 = vmatprep.subr.mxu0 0.0
  %42 = vmatpush1.msra.mxu0 %v22
  %43 = vmatprep.subr.mxu0 0.0
  %44 = vmatpush1.msra.mxu0 %v21
  %45 = vmatprep.subr.mxu0 0.0
  %46 = vmatpush1.msra.mxu0 %v20
  %47 = vmatprep.subr.mxu0 0.0
  %48 = vmatpush1.msra.mxu0 %v19
  %49 = vmatprep.subr.mxu0 0.0
  %50 = vmatpush1.msra.mxu0 %v18
  %51 = vmatprep.subr.mxu0 0.0
  %52 = vmatpush1.msra.mxu0 %v17
  %53 = vmatprep.subr.mxu0 0.0
  %54 = vmatpush1.msra.mxu0 %v16
  %55 = vmatprep.subr.mxu0 0.0
  %56 = vmatpush1.msra.mxu0 %v15
  %57 = vmatprep.subr.mxu0 0.0
  %58 = vmatpush1.msra.mxu0 %v14
  %59 = vmatprep.subr.mxu0 0.0
  %60 = vmatpush1.msra.mxu0 %v13
  %61 = vmatprep.subr.mxu0 0.0
  %62 = vmatpush2.msra.mxu0 0.0
  %63 = vmatprep.subr.mxu0 0.0
  %64 = vmatpush2.msra.mxu0 0.0
  %65 = vmatprep.subr.mxu0 0.0
  %66 = vmatpush2.msra.mxu0 0.0
  %67 = vmatprep.subr.mxu0 0.0
  %68 = vmatpush2.msra.mxu0 0.0
  %69 = vmatprep.subr.mxu0 0.0
  %70 = vmatpush2.msra.mxu0 0.0
  %71 = vmatprep.subr.mxu0 0.0
  %72 = vmatpush2.msra.mxu0 0.0
  %73 = vmatprep.subr.mxu0 0.0
  %74 = vmatpush2.msra.mxu0 0.0
  %75 = vmatprep.subr.mxu0 0.0
  %76 = vmatpush2.msra.mxu0 0.0
  %77 = vmatprep.subr.mxu0 0.0
  %78 = vmatpush2.msra.mxu0 0.0
  %79 = vmatprep.subr.mxu0 0.0
  %80 = vmatpush2.msra.mxu0 0.0
  %81 = vmatprep.subr.mxu0 0.0
  %82 = vmatpush2.msra.mxu0 0.0
  %83 = vmatprep.subr.mxu0 0.0
  %84 = vmatpush2.msra.mxu0 0.0
  %85 = vmatprep.subr.mxu0 0.0
  %86 = vmatpush2.msra.mxu0 0.0
  %87 = vmatprep.subr.mxu0 0.0
  %88 = vmatpush2.msra.mxu0 0.0
  %89 = vmatprep.subr.mxu0 0.0
  %90 = vmatpush2.msra.mxu0 0.0
  %91 = vmatprep.subr.mxu0 0.0
  %92 = vmatpush2.msra.mxu0 0.0
  %93 = vmatprep.mubr.f32.mxu0 0.0
  %94 = vmatmul.mubr.f32.gmra.mxu0 %v11
  %v95 = vpop.f32.mrf.mxu0
  %v96 = vadd.f32 0.0, %v95
  %v97 = vpop.f32.mrf.mxu0
  %98 = vmatprep.mubr.f32.mxu0 0.0
  %99 = vmatmul.mubr.f32.gmra.mxu0 %v12
  %v100 = vpop.f32.mrf.mxu0
  %v101 = vadd.f32 0.0, %v100
  %v102 = vpop.f32.mrf.mxu0
  %103 = vdwg.mxu0
  %104 = vst [vmem:[%s2] sm:$0xff] %v96
  %105 = vst [vmem:[%s2 + $0x8] sm:$0xff] %v101
  // Predicated region
  $region10: #{gcn_forward.4} parent=0 // pred_check
    _
  $region11: #{gcn_forward.4} parent=0 // pred_check_branch
    %107 = sbr.rel (0) target = $region13
  $region12: #{gcn_forward.4} parent=0 // pred_region
    _
  $region13: #{gcn_forward.4} parent=0 // pred_fallthru
    _
  // Predicated region
  $region14: #{gcn_forward.4} parent=0 // pred_check
    _
  $region15: #{gcn_forward.4} parent=0 // pred_check_branch
    %109 = sbr.rel (0) target = $region17
  $region16: #{gcn_forward.4} parent=0 // pred_region
    _
  $region17: #{gcn_forward.4} parent=0 // pred_fallthru
    _

// kernel: gcn_forward.7
$region0: #{gcn_forward.7}
  #allocation0 [shape = 'u32[]', space=smem, size = 0x4, offset = 0x4, fixed_abs, tag = 'smem constant byte address 0x4 - core index']
  #allocation1 [shape = 'u32[144,128]{1,0:T(1,128)}', space=vmem, size = 0x12000, scoped, tag = 'internal scratch']
  #allocation2 [shape = 'f32[16,128]{1,0:T(8,128)}', space=vmem, size = 0x2000, scoped, tag = 'scratch operand']
  %s0 = inlined_call_operand.vmem [shape: f32[16,16], index: 0, kind: input, shape index: {}]
  %s1 = inlined_call_operand.vmem [shape: f32[16,128], index: 1, kind: input, shape index: {}]
  %s2 = inlined_call_operand.vmem [shape: f32[1,128], index: 2, kind: input, shape index: {}]
  %s3 = inlined_call_operand.vmem [shape: f32[16,128], index: 3, kind: output, shape index: {}]
  %s4 = sld [smem:[#allocation0]]
  $region30: #{gcn_forward.7} parent=0
    _
  %s6 = ssub.s32 1, %s4
  %s7 = scalar_select 0, %s6, %s4
  // Predicated region
  $region2: #{gcn_forward.7} parent=0 // pred_check
    _
  $region3: #{gcn_forward.7} parent=0 // pred_check_branch
    %9 = sbr.rel (0) target = $region5
  $region4: #{gcn_forward.7} parent=0 // pred_region
    _
  $region5: #{gcn_forward.7} parent=0 // pred_fallthru
    _
  // Predicated region
  $region6: #{gcn_forward.7} parent=0 // pred_check
    _
  $region7: #{gcn_forward.7} parent=0 // pred_check_branch
    %11 = sbr.rel (0) target = $region9
  $region8: #{gcn_forward.7} parent=0 // pred_region
    _
  $region9: #{gcn_forward.7} parent=0 // pred_fallthru
    _
  // Predicated region
  $region10: #{gcn_forward.7} parent=0 // pred_check
    _
  $region11: #{gcn_forward.7} parent=0 // pred_check_branch
    %13 = sbr.rel (0) target = $region13
  $region12: #{gcn_forward.7} parent=0 // pred_region
    _
  $region13: #{gcn_forward.7} parent=0 // pred_fallthru
    _
  %p14 = scmp.eq.s32.totalorder 0, 0
  // Predicated region
  $region14: #{gcn_forward.7} parent=0 // pred_check
    %p15 = pneg %p14
  $region15: #{gcn_forward.7} parent=0 // pred_check_branch
    %17 = sbr.rel (%p15) target = $region17
  $region16: #{gcn_forward.7} parent=0 // pred_region
    %18 = vst [vmem:[#allocation2] sm:$0xff] 0.0
    %19 = vst [vmem:[#allocation2 + $0x8] sm:$0xff] 0.0
  $region17: #{gcn_forward.7} parent=0 // pred_fallthru
    _
  %v20 = vld [vmem:[#allocation2] sm:$0xff]
  %v21 = vld [vmem:[#allocation2 + $0x8] sm:$0xff]
  %v22 = vld [vmem:[%s0] sm:$0xff]
  %v23 = vld [vmem:[%s0 + $0x8] sm:$0xff]
  %v24 = vld [vmem:[%s1] sm:$0xff]
  %v25 = vld [vmem:[%s1 + $0x8] sm:$0xff]
  %vm26 = vcmask 130048
  %v28 = vsel %vm26, %v22, 0
  %v31 = vsel %vm26, %v23, 0
  %33 = vmatprep.subr.mxu0 0.0
  %34 = vmatpush1.msra.mxu0 0.0
  %35 = vmatprep.subr.mxu0 0.0
  %36 = vmatpush1.msra.mxu0 0.0
  %37 = vmatprep.subr.mxu0 0.0
  %38 = vmatpush1.msra.mxu0 0.0
  %39 = vmatprep.subr.mxu0 0.0
  %40 = vmatpush1.msra.mxu0 0.0
  %41 = vmatprep.subr.mxu0 0.0
  %42 = vmatpush1.msra.mxu0 0.0
  %43 = vmatprep.subr.mxu0 0.0
  %44 = vmatpush1.msra.mxu0 0.0
  %45 = vmatprep.subr.mxu0 0.0
  %46 = vmatpush1.msra.mxu0 0.0
  %47 = vmatprep.subr.mxu0 0.0
  %48 = vmatpush1.msra.mxu0 0.0
  %49 = vmatprep.subr.mxu0 0.0
  %50 = vmatpush1.msra.mxu0 0.0
  %51 = vmatprep.subr.mxu0 0.0
  %52 = vmatpush1.msra.mxu0 0.0
  %53 = vmatprep.subr.mxu0 0.0
  %54 = vmatpush1.msra.mxu0 0.0
  %55 = vmatprep.subr.mxu0 0.0
  %56 = vmatpush1.msra.mxu0 0.0
  %57 = vmatprep.subr.mxu0 0.0
  %58 = vmatpush1.msra.mxu0 0.0
  %59 = vmatprep.subr.mxu0 0.0
  %60 = vmatpush1.msra.mxu0 0.0
  %61 = vmatprep.subr.mxu0 0.0
  %62 = vmatpush1.msra.mxu0 %v25
  %63 = vmatprep.subr.mxu0 0.0
  %64 = vmatpush1.msra.mxu0 %v24
  %65 = vmatprep.subr.mxu0 0.0
  %66 = vmatpush2.msra.mxu0 0.0
  %67 = vmatprep.subr.mxu0 0.0
  %68 = vmatpush2.msra.mxu0 0.0
  %69 = vmatprep.subr.mxu0 0.0
  %70 = vmatpush2.msra.mxu0 0.0
  %71 = vmatprep.subr.mxu0 0.0
  %72 = vmatpush2.msra.mxu0 0.0
  %73 = vmatprep.subr.mxu0 0.0
  %74 = vmatpush2.msra.mxu0 0.0
  %75 = vmatprep.subr.mxu0 0.0
  %76 = vmatpush2.msra.mxu0 0.0
  %77 = vmatprep.subr.mxu0 0.0
  %78 = vmatpush2.msra.mxu0 0.0
  %79 = vmatprep.subr.mxu0 0.0
  %80 = vmatpush2.msra.mxu0 0.0
  %81 = vmatprep.subr.mxu0 0.0
  %82 = vmatpush2.msra.mxu0 0.0
  %83 = vmatprep.subr.mxu0 0.0
  %84 = vmatpush2.msra.mxu0 0.0
  %85 = vmatprep.subr.mxu0 0.0
  %86 = vmatpush2.msra.mxu0 0.0
  %87 = vmatprep.subr.mxu0 0.0
  %88 = vmatpush2.msra.mxu0 0.0
  %89 = vmatprep.subr.mxu0 0.0
  %90 = vmatpush2.msra.mxu0 0.0
  %91 = vmatprep.subr.mxu0 0.0
  %92 = vmatpush2.msra.mxu0 0.0
  %93 = vmatprep.subr.mxu0 0.0
  %94 = vmatpush2.msra.mxu0 0.0
  %95 = vmatprep.subr.mxu0 0.0
  %96 = vmatpush2.msra.mxu0 0.0
  %97 = vmatprep.mubr.f32.mxu0 0.0
  %98 = vmatmul.mubr.f32.gmra.mxu0 %v28
  %v99 = vpop.f32.mrf.mxu0
  %v100 = vadd.f32 0.0, %v99
  %v101 = vpop.f32.mrf.mxu0
  %102 = vmatprep.mubr.f32.mxu0 0.0
  %103 = vmatmul.mubr.f32.gmra.mxu0 %v31
  %v104 = vpop.f32.mrf.mxu0
  %v105 = vadd.f32 0.0, %v104
  %v106 = vpop.f32.mrf.mxu0
  %107 = vdwg.mxu0
  %v108 = vadd.f32 %v20, %v100
  %v109 = vadd.f32 %v21, %v105
  %110 = vst [vmem:[#allocation2] sm:$0xff] %v108
  %111 = vst [vmem:[#allocation2 + $0x8] sm:$0xff] %v109
  // Predicated region
  $region18: #{gcn_forward.7} parent=0 // pred_check
    %p112 = pneg %p14
  $region19: #{gcn_forward.7} parent=0 // pred_check_branch
    %114 = sbr.rel (%p112) target = $region21
  $region20: #{gcn_forward.7} parent=0 // pred_region
    %v115 = vld [vmem:[#allocation2] sm:$0xff]
    %v116 = vld [vmem:[#allocation2 + $0x8] sm:$0xff]
    %v117 = vld [vmem:[%s2] sm:$0x1]
    %v119 = vlaneseq
    %v120 = vshrl.u32 %v119, 7
    %v121 = vsub.s32 0, %v120
    %v122 = vrot.slane %v117, %v121
    %v124 = vadd.f32 %v115, %v122
    %v125 = vadd.f32 %v116, %v122
    %126 = vmax.xlane.f32.xlu0 %v124
    %v127 = vpop.xlane.xlu0 %126
    %128 = vmax.xlane.f32.xlu0 %v125
    %v129 = vpop.xlane.xlu0 %128
    %v130 = vsub.f32 %v124, %v127
    %v131 = vsub.f32 %v125, %v129
    %v132 = vmul.f32 %v130, 1.442695
    %v133 = vpow.pop %v132
    %v134 = vmul.f32 %v131, 1.442695
    %v135 = vpow.pop %v134
    %136 = vadd.xlane.f32.xlu0 %v133
    %v137 = vpop.xlane.xlu0 %136
    %138 = vadd.xlane.f32.xlu0 %v135
    %v139 = vpop.xlane.xlu0 %138
    %v140 = vlog2.pop %v137
    %v141 = vmul.f32 %v140, 0.6931472
    %v142 = vlog2.pop %v139
    %v143 = vmul.f32 %v142, 0.6931472
    %v144 = vsub.f32 %v130, %v141
    %v145 = vsub.f32 %v131, %v143
    %146 = vst [vmem:[%s3] sm:$0xff] %v144
    %147 = vst [vmem:[%s3 + $0x8] sm:$0xff] %v145
  $region21: #{gcn_forward.7} parent=0 // pred_fallthru
    _
  // Predicated region
  $region22: #{gcn_forward.7} parent=0 // pred_check
    _
  $region23: #{gcn_forward.7} parent=0 // pred_check_branch
    %149 = sbr.rel (0) target = $region25
  $region24: #{gcn_forward.7} parent=0 // pred_region
    _
  $region25: #{gcn_forward.7} parent=0 // pred_fallthru
    _
  // Predicated region
  $region26: #{gcn_forward.7} parent=0 // pred_check
    _
  $region27: #{gcn_forward.7} parent=0 // pred_check_branch
    %151 = sbr.rel (0) target = $region29
  $region28: #{gcn_forward.7} parent=0 // pred_region
    _
  $region29: #{gcn_forward.7} parent=0 // pred_fallthru
    _

// kernel: gcn_forward.5
$region0: #{gcn_forward.5}
  #allocation0 [shape = 'u32[]', space=smem, size = 0x4, offset = 0x4, fixed_abs, tag = 'smem constant byte address 0x4 - core index']
  #allocation1 [shape = 'u32[144,128]{1,0:T(1,128)}', space=vmem, size = 0x12000, scoped, tag = 'internal scratch']
  #allocation2 [shape = 'f32[16,128]{1,0:T(8,128)}', space=vmem, size = 0x2000, scoped, tag = 'scratch operand']
  %s0 = inlined_call_operand.vmem [shape: f32[16,16], index: 0, kind: input, shape index: {}]
  %s1 = inlined_call_operand.vmem [shape: f32[16,128], index: 1, kind: input, shape index: {}]
  %s2 = inlined_call_operand.vmem [shape: f32[1,128], index: 2, kind: input, shape index: {}]
  %s3 = inlined_call_operand.vmem [shape: f32[16,128], index: 3, kind: output, shape index: {}]
  %s4 = sld [smem:[#allocation0]]
  $region30: #{gcn_forward.5} parent=0
    _
  %s6 = ssub.s32 1, %s4
  %s7 = scalar_select 0, %s6, %s4
  // Predicated region
  $region2: #{gcn_forward.5} parent=0 // pred_check
    _
  $region3: #{gcn_forward.5} parent=0 // pred_check_branch
    %9 = sbr.rel (0) target = $region5
  $region4: #{gcn_forward.5} parent=0 // pred_region
    _
  $region5: #{gcn_forward.5} parent=0 // pred_fallthru
    _
  // Predicated region
  $region6: #{gcn_forward.5} parent=0 // pred_check
    _
  $region7: #{gcn_forward.5} parent=0 // pred_check_branch
    %11 = sbr.rel (0) target = $region9
  $region8: #{gcn_forward.5} parent=0 // pred_region
    _
  $region9: #{gcn_forward.5} parent=0 // pred_fallthru
    _
  // Predicated region
  $region10: #{gcn_forward.5} parent=0 // pred_check
    _
  $region11: #{gcn_forward.5} parent=0 // pred_check_branch
    %13 = sbr.rel (0) target = $region13
  $region12: #{gcn_forward.5} parent=0 // pred_region
    _
  $region13: #{gcn_forward.5} parent=0 // pred_fallthru
    _
  %p14 = scmp.eq.s32.totalorder 0, 0
  // Predicated region
  $region14: #{gcn_forward.5} parent=0 // pred_check
    %p15 = pneg %p14
  $region15: #{gcn_forward.5} parent=0 // pred_check_branch
    %17 = sbr.rel (%p15) target = $region17
  $region16: #{gcn_forward.5} parent=0 // pred_region
    %18 = vst [vmem:[#allocation2] sm:$0xff] 0.0
    %19 = vst [vmem:[#allocation2 + $0x8] sm:$0xff] 0.0
  $region17: #{gcn_forward.5} parent=0 // pred_fallthru
    _
  %v20 = vld [vmem:[#allocation2] sm:$0xff]
  %v21 = vld [vmem:[#allocation2 + $0x8] sm:$0xff]
  %v22 = vld [vmem:[%s0] sm:$0xff]
  %v23 = vld [vmem:[%s0 + $0x8] sm:$0xff]
  %v24 = vld [vmem:[%s1] sm:$0xff]
  %v25 = vld [vmem:[%s1 + $0x8] sm:$0xff]
  %vm26 = vcmask 130048
  %v28 = vsel %vm26, %v22, 0
  %v31 = vsel %vm26, %v23, 0
  %33 = vmatprep.subr.mxu0 0.0
  %34 = vmatpush1.msra.mxu0 0.0
  %35 = vmatprep.subr.mxu0 0.0
  %36 = vmatpush1.msra.mxu0 0.0
  %37 = vmatprep.subr.mxu0 0.0
  %38 = vmatpush1.msra.mxu0 0.0
  %39 = vmatprep.subr.mxu0 0.0
  %40 = vmatpush1.msra.mxu0 0.0
  %41 = vmatprep.subr.mxu0 0.0
  %42 = vmatpush1.msra.mxu0 0.0
  %43 = vmatprep.subr.mxu0 0.0
  %44 = vmatpush1.msra.mxu0 0.0
  %45 = vmatprep.subr.mxu0 0.0
  %46 = vmatpush1.msra.mxu0 0.0
  %47 = vmatprep.subr.mxu0 0.0
  %48 = vmatpush1.msra.mxu0 0.0
  %49 = vmatprep.subr.mxu0 0.0
  %50 = vmatpush1.msra.mxu0 0.0
  %51 = vmatprep.subr.mxu0 0.0
  %52 = vmatpush1.msra.mxu0 0.0
  %53 = vmatprep.subr.mxu0 0.0
  %54 = vmatpush1.msra.mxu0 0.0
  %55 = vmatprep.subr.mxu0 0.0
  %56 = vmatpush1.msra.mxu0 0.0
  %57 = vmatprep.subr.mxu0 0.0
  %58 = vmatpush1.msra.mxu0 0.0
  %59 = vmatprep.subr.mxu0 0.0
  %60 = vmatpush1.msra.mxu0 0.0
  %61 = vmatprep.subr.mxu0 0.0
  %62 = vmatpush1.msra.mxu0 %v25
  %63 = vmatprep.subr.mxu0 0.0
  %64 = vmatpush1.msra.mxu0 %v24
  %65 = vmatprep.subr.mxu0 0.0
  %66 = vmatpush2.msra.mxu0 0.0
  %67 = vmatprep.subr.mxu0 0.0
  %68 = vmatpush2.msra.mxu0 0.0
  %69 = vmatprep.subr.mxu0 0.0
  %70 = vmatpush2.msra.mxu0 0.0
  %71 = vmatprep.subr.mxu0 0.0
  %72 = vmatpush2.msra.mxu0 0.0
  %73 = vmatprep.subr.mxu0 0.0
  %74 = vmatpush2.msra.mxu0 0.0
  %75 = vmatprep.subr.mxu0 0.0
  %76 = vmatpush2.msra.mxu0 0.0
  %77 = vmatprep.subr.mxu0 0.0
  %78 = vmatpush2.msra.mxu0 0.0
  %79 = vmatprep.subr.mxu0 0.0
  %80 = vmatpush2.msra.mxu0 0.0
  %81 = vmatprep.subr.mxu0 0.0
  %82 = vmatpush2.msra.mxu0 0.0
  %83 = vmatprep.subr.mxu0 0.0
  %84 = vmatpush2.msra.mxu0 0.0
  %85 = vmatprep.subr.mxu0 0.0
  %86 = vmatpush2.msra.mxu0 0.0
  %87 = vmatprep.subr.mxu0 0.0
  %88 = vmatpush2.msra.mxu0 0.0
  %89 = vmatprep.subr.mxu0 0.0
  %90 = vmatpush2.msra.mxu0 0.0
  %91 = vmatprep.subr.mxu0 0.0
  %92 = vmatpush2.msra.mxu0 0.0
  %93 = vmatprep.subr.mxu0 0.0
  %94 = vmatpush2.msra.mxu0 0.0
  %95 = vmatprep.subr.mxu0 0.0
  %96 = vmatpush2.msra.mxu0 0.0
  %97 = vmatprep.mubr.f32.mxu0 0.0
  %98 = vmatmul.mubr.f32.gmra.mxu0 %v28
  %v99 = vpop.f32.mrf.mxu0
  %v100 = vadd.f32 0.0, %v99
  %v101 = vpop.f32.mrf.mxu0
  %102 = vmatprep.mubr.f32.mxu0 0.0
  %103 = vmatmul.mubr.f32.gmra.mxu0 %v31
  %v104 = vpop.f32.mrf.mxu0
  %v105 = vadd.f32 0.0, %v104
  %v106 = vpop.f32.mrf.mxu0
  %107 = vdwg.mxu0
  %v108 = vadd.f32 %v20, %v100
  %v109 = vadd.f32 %v21, %v105
  %110 = vst [vmem:[#allocation2] sm:$0xff] %v108
  %111 = vst [vmem:[#allocation2 + $0x8] sm:$0xff] %v109
  // Predicated region
  $region18: #{gcn_forward.5} parent=0 // pred_check
    %p112 = pneg %p14
  $region19: #{gcn_forward.5} parent=0 // pred_check_branch
    %114 = sbr.rel (%p112) target = $region21
  $region20: #{gcn_forward.5} parent=0 // pred_region
    %v115 = vld [vmem:[#allocation2] sm:$0xff]
    %v116 = vld [vmem:[#allocation2 + $0x8] sm:$0xff]
    %v117 = vld [vmem:[%s2] sm:$0x1]
    %v119 = vlaneseq
    %v120 = vshrl.u32 %v119, 7
    %v121 = vsub.s32 0, %v120
    %v122 = vrot.slane %v117, %v121
    %v124 = vadd.f32 %v115, %v122
    %v125 = vadd.f32 %v116, %v122
    %v126 = vmax.f32 %v124, 0.0
    %v127 = vmax.f32 %v125, 0.0
    %128 = vst [vmem:[%s3] sm:$0xff] %v126
    %129 = vst [vmem:[%s3 + $0x8] sm:$0xff] %v127
  $region21: #{gcn_forward.5} parent=0 // pred_fallthru
    _
  // Predicated region
  $region22: #{gcn_forward.5} parent=0 // pred_check
    _
  $region23: #{gcn_forward.5} parent=0 // pred_check_branch
    %131 = sbr.rel (0) target = $region25
  $region24: #{gcn_forward.5} parent=0 // pred_region
    _
  $region25: #{gcn_forward.5} parent=0 // pred_fallthru
    _
  // Predicated region
  $region26: #{gcn_forward.5} parent=0 // pred_check
    _
  $region27: #{gcn_forward.5} parent=0 // pred_check_branch
    %133 = sbr.rel (0) target = $region29
  $region28: #{gcn_forward.5} parent=0 // pred_region
    _
  $region29: #{gcn_forward.5} parent=0 // pred_fallthru
    _

</llo_original>
